<compile_context>
chip_gen: v5e
topology: v5e:2x2
jax: 0.10.0
libtpu: 0.0.40
codegen_flags: <defaults>
</compile_context>

<pallas_src>
import jax
import jax.numpy as jnp
from jax import lax
from jax.experimental import pallas as pl
from jax.experimental.pallas import tpu as pltpu

# ---- small, module-consistent sizes ----
B = 2             # batch
P = 16            # num_pixels (vision sequence length)
D_MODEL = 32      # attention_dim == cross-attention d_model == encoder_dim // 2
ENC_DIM = 2 * D_MODEL
TEXT_DIM = 1000   # hardwired in nn.Linear(1000, attention_dim)
TEXT_PAD = 1024   # contraction dim padded to a multiple of 128 for clean MXU tiles
N_HEAD = 4        # head_dim = D_MODEL // N_HEAD (reference path only)
LN_EPS = 1e-5


def _tv_attention_kernel(text_ref, word_ref, v1_ref, v2_ref,
                         w2_ref, b2_ref,
                         wv_ref, bv_ref, wo_ref, bo_ref,
                         gamma_ref, beta_ref,
                         w1a_ref, w1b_ref, b1_ref,
                         out_ref):
    vision1 = v1_ref[...]                                  # (B, P, D_MODEL)
    vision2 = v2_ref[...]                                  # (B, P, D_MODEL)

    # nn2: Linear(1000 -> attention_dim). bf16 operands, f32 accumulate on the MXU.
    text_proj = (jnp.dot(text_ref[...], w2_ref[...],
                         preferred_element_type=jnp.float32)
                 + b2_ref[...])                            # (B, D_MODEL)

    # sim_mapv_T = vision1 * TextFeature ; softmax over the pixel axis (dim=-2)
    sim = vision1 * text_proj[:, None, :]                  # (B, P, D_MODEL)
    m = jnp.max(sim, axis=1, keepdims=True)
    e = jnp.exp(sim - m)
    denom = jnp.sum(e, axis=1, keepdims=True)
    sm = e * pl.reciprocal(denom, approx=True)             # EUP reciprocal
    vision1_T = vision1 * sm + vision1
    mean1 = jnp.mean(vision1_T, axis=1)                    # (B, D_MODEL)

    # CrossAttention(vision2, wordFeature): key/value seq len is 1, so per head the
    # softmax over keys is identically 1 and the q/k projections cancel exactly.
    # The out-projection is applied to the single value row BEFORE broadcasting
    # over the P query positions (exact, removes a 16x-redundant matmul).
    v_row = (jnp.dot(word_ref[...], wv_ref[...],
                     preferred_element_type=jnp.float32) + bv_ref[...])   # (B, D_MODEL)
    attn_row = (jnp.dot(v_row, wo_ref[...],
                        preferred_element_type=jnp.float32) + bo_ref[...])  # (B, D_MODEL)

    # residual -> LayerNorm(last dim) -> ReLU, then outer residual with vision2
    res = vision2 + attn_row[:, None, :]                   # (B, P, D_MODEL)
    mu = jnp.mean(res, axis=-1, keepdims=True)
    var = jnp.mean((res - mu) * (res - mu), axis=-1, keepdims=True)
    normed = (res - mu) * lax.rsqrt(var + LN_EPS) * gamma_ref[...] + beta_ref[...]
    vision2_w = jnp.maximum(normed, 0.0) + vision2
    mean2 = jnp.mean(vision2_w, axis=1)                    # (B, D_MODEL)

    # nn1(cat([vision1_T, vision2_w], dim=2)).mean(1)
    #   == mean(vision1_T) @ W1[:D] + mean(vision2_w) @ W1[D:] + b1   (mean is linear)
    out = (jnp.dot(mean1, w1a_ref[...], preferred_element_type=jnp.float32)
           + jnp.dot(mean2, w1b_ref[...], preferred_element_type=jnp.float32)
           + b1_ref[...])                                  # (B, ENC_DIM)
    out_ref[...] = out


def tv_attention(text, word, vision, params):
    # Glue done outside the kernel: chunk the vision channels, pad the text
    # contraction dim to 1024 and cast the (only large) GEMM operands to bf16,
    # and split nn1's weight so the kernel never loads-then-slices it.
    vision1 = vision[:, :, :D_MODEL]                       # (B, P, D_MODEL)
    vision2 = vision[:, :, D_MODEL:]                       # (B, P, D_MODEL)
    text_p = jnp.pad(text, ((0, 0), (0, TEXT_PAD - TEXT_DIM))).astype(jnp.bfloat16)
    w2_p = jnp.pad(params["w2t"],
                   ((0, TEXT_PAD - TEXT_DIM), (0, 0))).astype(jnp.bfloat16)
    w1a = params["w1t"][:D_MODEL, :]                       # (D_MODEL, ENC_DIM)
    w1b = params["w1t"][D_MODEL:, :]                       # (D_MODEL, ENC_DIM)

    full2 = lambda i: (0, 0)
    full3 = lambda i: (0, 0, 0)

    in_specs = [
        pl.BlockSpec((B, TEXT_PAD), full2),        # text (bf16, padded)
        pl.BlockSpec((B, D_MODEL), full2),         # word
        pl.BlockSpec((B, P, D_MODEL), full3),      # vision1
        pl.BlockSpec((B, P, D_MODEL), full3),      # vision2
        pl.BlockSpec((TEXT_PAD, D_MODEL), full2),  # w2t (bf16, padded)
        pl.BlockSpec((1, D_MODEL), full2),         # b2
        pl.BlockSpec((D_MODEL, D_MODEL), full2),   # wvt (value projection)
        pl.BlockSpec((1, D_MODEL), full2),         # bv
        pl.BlockSpec((D_MODEL, D_MODEL), full2),   # wot (attention out_proj)
        pl.BlockSpec((1, D_MODEL), full2),         # bo
        pl.BlockSpec((1, D_MODEL), full2),         # gamma (LayerNorm weight)
        pl.BlockSpec((1, D_MODEL), full2),         # beta  (LayerNorm bias)
        pl.BlockSpec((D_MODEL, ENC_DIM), full2),   # w1t rows [:D_MODEL]
        pl.BlockSpec((D_MODEL, ENC_DIM), full2),   # w1t rows [D_MODEL:]
        pl.BlockSpec((1, ENC_DIM), full2),         # b1
    ]
    out_spec = pl.BlockSpec((B, ENC_DIM), full2)

    return pl.pallas_call(
        _tv_attention_kernel,
        out_shape=jax.ShapeDtypeStruct((B, ENC_DIM), jnp.float32),
        grid_spec=pltpu.PrefetchScalarGridSpec(
            num_scalar_prefetch=0,
            grid=(1,),                              # single step: whole batch at once
            in_specs=in_specs,
            out_specs=out_spec,
        ),
    )(text_p, word, vision1, vision2,
      w2_p, params["b2"],
      params["wvt"], params["bv"], params["wot"], params["bo"],
      params["gamma"], params["beta"],
      w1a, w1b, params["b1"])


def init_params(key):
    ks = jax.random.split(key, 14)
    s = 0.05
    n = lambda k, shp: jax.random.normal(k, shp, jnp.float32) * s
    return {
        "w2t": n(ks[0], (TEXT_DIM, D_MODEL)), "b2": n(ks[1], (1, D_MODEL)),
        # MHA in-projections (q/k kept only for the pure-JAX reference; they
        # provably do not affect the output because the key/value seq len is 1).
        "wqt": n(ks[2], (D_MODEL, D_MODEL)), "bq": n(ks[3], (1, D_MODEL)),
        "wkt": n(ks[4], (D_MODEL, D_MODEL)), "bk": n(ks[5], (1, D_MODEL)),
        "wvt": n(ks[6], (D_MODEL, D_MODEL)), "bv": n(ks[7], (1, D_MODEL)),
        "wot": n(ks[8], (D_MODEL, D_MODEL)), "bo": n(ks[9], (1, D_MODEL)),
        "gamma": jnp.ones((1, D_MODEL), jnp.float32) + n(ks[10], (1, D_MODEL)),
        "beta": n(ks[11], (1, D_MODEL)),
        "w1t": n(ks[12], (ENC_DIM, ENC_DIM)), "b1": n(ks[13], (1, ENC_DIM)),
    }


def reference(text, word, vision, params):
    """Pure-JAX f32 mirror of the PyTorch forward (full multi-head attention path)."""
    vision1 = vision[:, :, :D_MODEL]
    vision2 = vision[:, :, D_MODEL:]
    text_proj = text[:, None, :] @ params["w2t"] + params["b2"]
    sim = vision1 * text_proj
    vision1_T = vision1 * jax.nn.softmax(sim, axis=-2) + vision1

    word3 = word[:, None, :]
    q = vision2 @ params["wqt"] + params["bq"]
    k = word3 @ params["wkt"] + params["bk"]
    v = word3 @ params["wvt"] + params["bv"]
    hd = D_MODEL // N_HEAD
    qh = q.reshape(B, P, N_HEAD, hd).transpose(0, 2, 1, 3)
    kh = k.reshape(B, 1, N_HEAD, hd).transpose(0, 2, 1, 3)
    vh = v.reshape(B, 1, N_HEAD, hd).transpose(0, 2, 1, 3)
    scores = jnp.einsum("bhqd,bhkd->bhqk", qh, kh) / jnp.sqrt(hd)
    w = jax.nn.softmax(scores, axis=-1)
    attn = jnp.einsum("bhqk,bhkd->bhqd", w, vh).transpose(0, 2, 1, 3).reshape(B, P, D_MODEL)
    attn_out = attn @ params["wot"] + params["bo"]

    res = vision2 + attn_out
    mu = res.mean(-1, keepdims=True)
    var = ((res - mu) ** 2).mean(-1, keepdims=True)
    normed = (res - mu) / jnp.sqrt(var + LN_EPS) * params["gamma"] + params["beta"]
    vision2_w = jax.nn.relu(normed) + vision2

    x_cat = jnp.concatenate([vision1_T, vision2_w], axis=-1)
    y = x_cat @ params["w1t"] + params["b1"]
    return y.mean(axis=1)


if __name__ == "__main__":
    key = jax.random.PRNGKey(0)
    k_text, k_word, k_vis, k_par = jax.random.split(key, 4)
    text = jax.random.normal(k_text, (B, TEXT_DIM), jnp.float32)
    word = jax.random.normal(k_word, (B, D_MODEL), jnp.float32)
    vision = jax.random.normal(k_vis, (B, P, ENC_DIM), jnp.float32)
    params = init_params(k_par)

    out = tv_attention(text, word, vision, params)
    out = jax.block_until_ready(out)

    ref = reference(text, word, vision, params)
    assert out.shape == (B, ENC_DIM), out.shape
    # 2e-3 tolerance: the kernel intentionally runs the text GEMM with bf16 MXU
    # operands (f32 accumulate) and uses the EUP approximate reciprocal in the
    # softmax; both are far below this budget, real bugs would be O(0.05+).
    assert jnp.allclose(out, ref, rtol=2e-3, atol=2e-3), (
        float(jnp.max(jnp.abs(out - ref))))

    # TODO(synk): dropout layers (p=0.5) are identity here (inference/eval semantics);
    # train-mode stochastic dropout is not modeled.
    print("KERNEL_OK")
</pallas_src>

<mosaic_0001>
module attributes {stable_mosaic.version = 11 : i64} {
  func.func @_tv_attention_kernel(%arg0: i32, %arg1: memref<2x1024xbf16, #tpu.memory_space<vmem>>, %arg2: memref<2x32xf32, #tpu.memory_space<vmem>>, %arg3: memref<2x16x32xf32, #tpu.memory_space<vmem>>, %arg4: memref<2x16x32xf32, #tpu.memory_space<vmem>>, %arg5: memref<1024x32xbf16, #tpu.memory_space<vmem>>, %arg6: memref<1x32xf32, #tpu.memory_space<vmem>>, %arg7: memref<32x32xf32, #tpu.memory_space<vmem>>, %arg8: memref<1x32xf32, #tpu.memory_space<vmem>>, %arg9: memref<32x32xf32, #tpu.memory_space<vmem>>, %arg10: memref<1x32xf32, #tpu.memory_space<vmem>>, %arg11: memref<1x32xf32, #tpu.memory_space<vmem>>, %arg12: memref<1x32xf32, #tpu.memory_space<vmem>>, %arg13: memref<32x64xf32, #tpu.memory_space<vmem>>, %arg14: memref<32x64xf32, #tpu.memory_space<vmem>>, %arg15: memref<1x64xf32, #tpu.memory_space<vmem>>, %arg16: memref<2x64xf32, #tpu.memory_space<vmem>>) attributes {dimension_semantics = [#tpu.dimension_semantics<arbitrary>], iteration_bounds = array<i64: 1>, scalar_prefetch = 0 : i64, scratch_operands = 0 : i64, tpu.core_type = #tpu.core_type<tc>, window_params = [{pipeline_mode = #tpu.pipeline_mode<synchronous>, transform_indices = @transform_0, window_bounds = array<i64: 2, 1024>}, {pipeline_mode = #tpu.pipeline_mode<synchronous>, transform_indices = @transform_1, window_bounds = array<i64: 2, 32>}, {pipeline_mode = #tpu.pipeline_mode<synchronous>, transform_indices = @transform_2, window_bounds = array<i64: 2, 16, 32>}, {pipeline_mode = #tpu.pipeline_mode<synchronous>, transform_indices = @transform_3, window_bounds = array<i64: 2, 16, 32>}, {pipeline_mode = #tpu.pipeline_mode<synchronous>, transform_indices = @transform_4, window_bounds = array<i64: 1024, 32>}, {pipeline_mode = #tpu.pipeline_mode<synchronous>, transform_indices = @transform_5, window_bounds = array<i64: 1, 32>}, {pipeline_mode = #tpu.pipeline_mode<synchronous>, transform_indices = @transform_6, window_bounds = array<i64: 32, 32>}, {pipeline_mode = #tpu.pipeline_mode<synchronous>, transform_indices = @transform_7, window_bounds = array<i64: 1, 32>}, {pipeline_mode = #tpu.pipeline_mode<synchronous>, transform_indices = @transform_8, window_bounds = array<i64: 32, 32>}, {pipeline_mode = #tpu.pipeline_mode<synchronous>, transform_indices = @transform_9, window_bounds = array<i64: 1, 32>}, {pipeline_mode = #tpu.pipeline_mode<synchronous>, transform_indices = @transform_10, window_bounds = array<i64: 1, 32>}, {pipeline_mode = #tpu.pipeline_mode<synchronous>, transform_indices = @transform_11, window_bounds = array<i64: 1, 32>}, {pipeline_mode = #tpu.pipeline_mode<synchronous>, transform_indices = @transform_12, window_bounds = array<i64: 32, 64>}, {pipeline_mode = #tpu.pipeline_mode<synchronous>, transform_indices = @transform_13, window_bounds = array<i64: 32, 64>}, {pipeline_mode = #tpu.pipeline_mode<synchronous>, transform_indices = @transform_14, window_bounds = array<i64: 1, 64>}, {pipeline_mode = #tpu.pipeline_mode<synchronous>, transform_indices = @transform_15, window_bounds = array<i64: 2, 64>}]} {
    %c0 = arith.constant 0 : index
    %c0_0 = arith.constant 0 : index
    %c0_1 = arith.constant 0 : index
    %0 = vector.load %arg3[%c0, %c0_0, %c0_1] : memref<2x16x32xf32, #tpu.memory_space<vmem>>, vector<2x16x32xf32>
    %c0_2 = arith.constant 0 : index
    %c0_3 = arith.constant 0 : index
    %c0_4 = arith.constant 0 : index
    %1 = vector.load %arg4[%c0_2, %c0_3, %c0_4] : memref<2x16x32xf32, #tpu.memory_space<vmem>>, vector<2x16x32xf32>
    %c0_5 = arith.constant 0 : index
    %c0_6 = arith.constant 0 : index
    %2 = vector.load %arg1[%c0_5, %c0_6] : memref<2x1024xbf16, #tpu.memory_space<vmem>>, vector<2x1024xbf16>
    %c0_7 = arith.constant 0 : index
    %c0_8 = arith.constant 0 : index
    %3 = vector.load %arg5[%c0_7, %c0_8] : memref<1024x32xbf16, #tpu.memory_space<vmem>>, vector<1024x32xbf16>
    %cst = arith.constant dense<0.000000e+00> : vector<2x32xf32>
    %4 = tpu.matmul %2, %3, %cst {dimension_numbers = #tpu.dot_dimension_numbers<[1], [0], [0], [1], [0, 0, 1, 1], [], []>} : vector<2x1024xbf16>, vector<1024x32xbf16>, vector<2x32xf32> -> vector<2x32xf32>
    %c0_9 = arith.constant 0 : index
    %c0_10 = arith.constant 0 : index
    %5 = vector.load %arg6[%c0_9, %c0_10] : memref<1x32xf32, #tpu.memory_space<vmem>>, vector<1x32xf32>
    %6 = vector.broadcast %5 : vector<1x32xf32> to vector<2x32xf32>
    %7 = arith.addf %4, %6 : vector<2x32xf32>
    %8 = vector.shape_cast %7 : vector<2x32xf32> to vector<2x1x32xf32>
    %9 = vector.broadcast %8 : vector<2x1x32xf32> to vector<2x16x32xf32>
    %10 = arith.mulf %0, %9 : vector<2x16x32xf32>
    %cst_11 = arith.constant dense<0xFF800000> : vector<2x32xf32>
    %11 = vector.multi_reduction <maximumf>, %10, %cst_11 [1] : vector<2x16x32xf32> to vector<2x32xf32>
    %12 = vector.shape_cast %11 : vector<2x32xf32> to vector<2x1x32xf32>
    %13 = vector.broadcast %12 : vector<2x1x32xf32> to vector<2x16x32xf32>
    %14 = arith.subf %10, %13 : vector<2x16x32xf32>
    %15 = math.exp %14 : vector<2x16x32xf32>
    %cst_12 = arith.constant dense<0.000000e+00> : vector<2x32xf32>
    %16 = vector.multi_reduction <add>, %15, %cst_12 [1] : vector<2x16x32xf32> to vector<2x32xf32>
    %17 = vector.shape_cast %16 : vector<2x32xf32> to vector<2x1x32xf32>
    %18 = tpu.reciprocal %17 {approx = true} : vector<2x1x32xf32> -> vector<2x1x32xf32>
    %19 = vector.broadcast %18 : vector<2x1x32xf32> to vector<2x16x32xf32>
    %20 = arith.mulf %15, %19 : vector<2x16x32xf32>
    %21 = arith.mulf %0, %20 : vector<2x16x32xf32>
    %22 = arith.addf %21, %0 : vector<2x16x32xf32>
    %cst_13 = arith.constant dense<0.000000e+00> : vector<2x32xf32>
    %23 = vector.multi_reduction <add>, %22, %cst_13 [1] : vector<2x16x32xf32> to vector<2x32xf32>
    %cst_14 = arith.constant 1.600000e+01 : f32
    %24 = vector.broadcast %cst_14 : f32 to vector<2x32xf32>
    %25 = arith.divf %23, %24 : vector<2x32xf32>
    %c0_15 = arith.constant 0 : index
    %c0_16 = arith.constant 0 : index
    %26 = vector.load %arg2[%c0_15, %c0_16] : memref<2x32xf32, #tpu.memory_space<vmem>>, vector<2x32xf32>
    %c0_17 = arith.constant 0 : index
    %c0_18 = arith.constant 0 : index
    %27 = vector.load %arg7[%c0_17, %c0_18] : memref<32x32xf32, #tpu.memory_space<vmem>>, vector<32x32xf32>
    %cst_19 = arith.constant dense<0.000000e+00> : vector<2x32xf32>
    %28 = tpu.matmul %26, %27, %cst_19 {dimension_numbers = #tpu.dot_dimension_numbers<[1], [0], [0], [1], [0, 0, 1, 1], [], []>} : vector<2x32xf32>, vector<32x32xf32>, vector<2x32xf32> -> vector<2x32xf32>
    %c0_20 = arith.constant 0 : index
    %c0_21 = arith.constant 0 : index
    %29 = vector.load %arg8[%c0_20, %c0_21] : memref<1x32xf32, #tpu.memory_space<vmem>>, vector<1x32xf32>
    %30 = vector.broadcast %29 : vector<1x32xf32> to vector<2x32xf32>
    %31 = arith.addf %28, %30 : vector<2x32xf32>
    %c0_22 = arith.constant 0 : index
    %c0_23 = arith.constant 0 : index
    %32 = vector.load %arg9[%c0_22, %c0_23] : memref<32x32xf32, #tpu.memory_space<vmem>>, vector<32x32xf32>
    %cst_24 = arith.constant dense<0.000000e+00> : vector<2x32xf32>
    %33 = tpu.matmul %31, %32, %cst_24 {dimension_numbers = #tpu.dot_dimension_numbers<[1], [0], [0], [1], [0, 0, 1, 1], [], []>} : vector<2x32xf32>, vector<32x32xf32>, vector<2x32xf32> -> vector<2x32xf32>
    %c0_25 = arith.constant 0 : index
    %c0_26 = arith.constant 0 : index
    %34 = vector.load %arg10[%c0_25, %c0_26] : memref<1x32xf32, #tpu.memory_space<vmem>>, vector<1x32xf32>
    %35 = vector.broadcast %34 : vector<1x32xf32> to vector<2x32xf32>
    %36 = arith.addf %33, %35 : vector<2x32xf32>
    %37 = vector.shape_cast %36 : vector<2x32xf32> to vector<2x1x32xf32>
    %38 = vector.broadcast %37 : vector<2x1x32xf32> to vector<2x16x32xf32>
    %39 = arith.addf %1, %38 : vector<2x16x32xf32>
    %cst_27 = arith.constant dense<0.000000e+00> : vector<2x16xf32>
    %40 = vector.multi_reduction <add>, %39, %cst_27 [2] : vector<2x16x32xf32> to vector<2x16xf32>
    %41 = vector.shape_cast %40 : vector<2x16xf32> to vector<2x16x1xf32>
    %cst_28 = arith.constant 3.200000e+01 : f32
    %42 = vector.broadcast %cst_28 : f32 to vector<2x16x1xf32>
    %43 = arith.divf %41, %42 : vector<2x16x1xf32>
    %44 = vector.broadcast %43 : vector<2x16x1xf32> to vector<2x16x32xf32>
    %45 = arith.subf %39, %44 : vector<2x16x32xf32>
    %46 = vector.broadcast %43 : vector<2x16x1xf32> to vector<2x16x32xf32>
    %47 = arith.subf %39, %46 : vector<2x16x32xf32>
    %48 = arith.mulf %45, %47 : vector<2x16x32xf32>
    %cst_29 = arith.constant dense<0.000000e+00> : vector<2x16xf32>
    %49 = vector.multi_reduction <add>, %48, %cst_29 [2] : vector<2x16x32xf32> to vector<2x16xf32>
    %50 = vector.shape_cast %49 : vector<2x16xf32> to vector<2x16x1xf32>
    %cst_30 = arith.constant 3.200000e+01 : f32
    %51 = vector.broadcast %cst_30 : f32 to vector<2x16x1xf32>
    %52 = arith.divf %50, %51 : vector<2x16x1xf32>
    %53 = vector.broadcast %43 : vector<2x16x1xf32> to vector<2x16x32xf32>
    %54 = arith.subf %39, %53 : vector<2x16x32xf32>
    %cst_31 = arith.constant 9.99999974E-6 : f32
    %55 = vector.broadcast %cst_31 : f32 to vector<2x16x1xf32>
    %56 = arith.addf %52, %55 : vector<2x16x1xf32>
    %57 = math.rsqrt %56 : vector<2x16x1xf32>
    %58 = vector.broadcast %57 : vector<2x16x1xf32> to vector<2x16x32xf32>
    %59 = arith.mulf %54, %58 : vector<2x16x32xf32>
    %c0_32 = arith.constant 0 : index
    %c0_33 = arith.constant 0 : index
    %60 = vector.load %arg11[%c0_32, %c0_33] : memref<1x32xf32, #tpu.memory_space<vmem>>, vector<1x32xf32>
    %61 = vector.shape_cast %60 : vector<1x32xf32> to vector<1x1x32xf32>
    %62 = vector.broadcast %61 : vector<1x1x32xf32> to vector<2x16x32xf32>
    %63 = arith.mulf %59, %62 : vector<2x16x32xf32>
    %c0_34 = arith.constant 0 : index
    %c0_35 = arith.constant 0 : index
    %64 = vector.load %arg12[%c0_34, %c0_35] : memref<1x32xf32, #tpu.memory_space<vmem>>, vector<1x32xf32>
    %65 = vector.shape_cast %64 : vector<1x32xf32> to vector<1x1x32xf32>
    %66 = vector.broadcast %65 : vector<1x1x32xf32> to vector<2x16x32xf32>
    %67 = arith.addf %63, %66 : vector<2x16x32xf32>
    %cst_36 = arith.constant 0.000000e+00 : f32
    %68 = vector.broadcast %cst_36 : f32 to vector<2x16x32xf32>
    %69 = arith.maximumf %67, %68 : vector<2x16x32xf32>
    %70 = arith.addf %69, %1 : vector<2x16x32xf32>
    %cst_37 = arith.constant dense<0.000000e+00> : vector<2x32xf32>
    %71 = vector.multi_reduction <add>, %70, %cst_37 [1] : vector<2x16x32xf32> to vector<2x32xf32>
    %cst_38 = arith.constant 1.600000e+01 : f32
    %72 = vector.broadcast %cst_38 : f32 to vector<2x32xf32>
    %73 = arith.divf %71, %72 : vector<2x32xf32>
    %c0_39 = arith.constant 0 : index
    %c0_40 = arith.constant 0 : index
    %74 = vector.load %arg13[%c0_39, %c0_40] : memref<32x64xf32, #tpu.memory_space<vmem>>, vector<32x64xf32>
    %cst_41 = arith.constant dense<0.000000e+00> : vector<2x64xf32>
    %75 = tpu.matmul %25, %74, %cst_41 {dimension_numbers = #tpu.dot_dimension_numbers<[1], [0], [0], [1], [0, 0, 1, 1], [], []>} : vector<2x32xf32>, vector<32x64xf32>, vector<2x64xf32> -> vector<2x64xf32>
    %c0_42 = arith.constant 0 : index
    %c0_43 = arith.constant 0 : index
    %76 = vector.load %arg14[%c0_42, %c0_43] : memref<32x64xf32, #tpu.memory_space<vmem>>, vector<32x64xf32>
    %cst_44 = arith.constant dense<0.000000e+00> : vector<2x64xf32>
    %77 = tpu.matmul %73, %76, %cst_44 {dimension_numbers = #tpu.dot_dimension_numbers<[1], [0], [0], [1], [0, 0, 1, 1], [], []>} : vector<2x32xf32>, vector<32x64xf32>, vector<2x64xf32> -> vector<2x64xf32>
    %78 = arith.addf %75, %77 : vector<2x64xf32>
    %c0_45 = arith.constant 0 : index
    %c0_46 = arith.constant 0 : index
    %79 = vector.load %arg15[%c0_45, %c0_46] : memref<1x64xf32, #tpu.memory_space<vmem>>, vector<1x64xf32>
    %80 = vector.broadcast %79 : vector<1x64xf32> to vector<2x64xf32>
    %81 = arith.addf %78, %80 : vector<2x64xf32>
    %c0_47 = arith.constant 0 : index
    %c0_48 = arith.constant 0 : index
    %82 = vector.load %arg16[%c0_47, %c0_48] : memref<2x64xf32, #tpu.memory_space<vmem>>, vector<2x64xf32>
    tpu.vector_store %arg16[%c0_47, %c0_48], %81 {strides = array<i32>} : memref<2x64xf32, #tpu.memory_space<vmem>>, vector<2x64xf32>,
    return
  }
  func.func @transform_0(%arg0: i32) -> (i32, i32) {
    %c0_i32 = arith.constant 0 : i32
    %c0_i32_0 = arith.constant 0 : i32
    %c0_i32_1 = arith.constant 0 : i32
    return %c0_i32, %c0_i32_0 : i32, i32
  }
  func.func @transform_1(%arg0: i32) -> (i32, i32) {
    %c0_i32 = arith.constant 0 : i32
    %c0_i32_0 = arith.constant 0 : i32
    %c0_i32_1 = arith.constant 0 : i32
    return %c0_i32, %c0_i32_0 : i32, i32
  }
  func.func @transform_2(%arg0: i32) -> (i32, i32, i32) {
    %c0_i32 = arith.constant 0 : i32
    %c0_i32_0 = arith.constant 0 : i32
    %c0_i32_1 = arith.constant 0 : i32
    %c0_i32_2 = arith.constant 0 : i32
    return %c0_i32, %c0_i32_0, %c0_i32_1 : i32, i32, i32
  }
  func.func @transform_3(%arg0: i32) -> (i32, i32, i32) {
    %c0_i32 = arith.constant 0 : i32
    %c0_i32_0 = arith.constant 0 : i32
    %c0_i32_1 = arith.constant 0 : i32
    %c0_i32_2 = arith.constant 0 : i32
    return %c0_i32, %c0_i32_0, %c0_i32_1 : i32, i32, i32
  }
  func.func @transform_4(%arg0: i32) -> (i32, i32) {
    %c0_i32 = arith.constant 0 : i32
    %c0_i32_0 = arith.constant 0 : i32
    %c0_i32_1 = arith.constant 0 : i32
    return %c0_i32, %c0_i32_0 : i32, i32
  }
  func.func @transform_5(%arg0: i32) -> (i32, i32) {
    %c0_i32 = arith.constant 0 : i32
    %c0_i32_0 = arith.constant 0 : i32
    %c0_i32_1 = arith.constant 0 : i32
    return %c0_i32, %c0_i32_0 : i32, i32
  }
  func.func @transform_6(%arg0: i32) -> (i32, i32) {
    %c0_i32 = arith.constant 0 : i32
    %c0_i32_0 = arith.constant 0 : i32
    %c0_i32_1 = arith.constant 0 : i32
    return %c0_i32, %c0_i32_0 : i32, i32
  }
  func.func @transform_7(%arg0: i32) -> (i32, i32) {
    %c0_i32 = arith.constant 0 : i32
    %c0_i32_0 = arith.constant 0 : i32
    %c0_i32_1 = arith.constant 0 : i32
    return %c0_i32, %c0_i32_0 : i32, i32
  }
  func.func @transform_8(%arg0: i32) -> (i32, i32) {
    %c0_i32 = arith.constant 0 : i32
    %c0_i32_0 = arith.constant 0 : i32
    %c0_i32_1 = arith.constant 0 : i32
    return %c0_i32, %c0_i32_0 : i32, i32
  }
  func.func @transform_9(%arg0: i32) -> (i32, i32) {
    %c0_i32 = arith.constant 0 : i32
    %c0_i32_0 = arith.constant 0 : i32
    %c0_i32_1 = arith.constant 0 : i32
    return %c0_i32, %c0_i32_0 : i32, i32
  }
  func.func @transform_10(%arg0: i32) -> (i32, i32) {
    %c0_i32 = arith.constant 0 : i32
    %c0_i32_0 = arith.constant 0 : i32
    %c0_i32_1 = arith.constant 0 : i32
    return %c0_i32, %c0_i32_0 : i32, i32
  }
  func.func @transform_11(%arg0: i32) -> (i32, i32) {
    %c0_i32 = arith.constant 0 : i32
    %c0_i32_0 = arith.constant 0 : i32
    %c0_i32_1 = arith.constant 0 : i32
    return %c0_i32, %c0_i32_0 : i32, i32
  }
  func.func @transform_12(%arg0: i32) -> (i32, i32) {
    %c0_i32 = arith.constant 0 : i32
    %c0_i32_0 = arith.constant 0 : i32
    %c0_i32_1 = arith.constant 0 : i32
    return %c0_i32, %c0_i32_0 : i32, i32
  }
  func.func @transform_13(%arg0: i32) -> (i32, i32) {
    %c0_i32 = arith.constant 0 : i32
    %c0_i32_0 = arith.constant 0 : i32
    %c0_i32_1 = arith.constant 0 : i32
    return %c0_i32, %c0_i32_0 : i32, i32
  }
  func.func @transform_14(%arg0: i32) -> (i32, i32) {
    %c0_i32 = arith.constant 0 : i32
    %c0_i32_0 = arith.constant 0 : i32
    %c0_i32_1 = arith.constant 0 : i32
    return %c0_i32, %c0_i32_0 : i32, i32
  }
  func.func @transform_15(%arg0: i32) -> (i32, i32) {
    %c0_i32 = arith.constant 0 : i32
    %c0_i32_0 = arith.constant 0 : i32
    %c0_i32_1 = arith.constant 0 : i32
    return %c0_i32, %c0_i32_0 : i32, i32
  }
}

</mosaic_0001>

<llo_original>
// kernel: tpu_custom_call.1
$region0: #{tpu_custom_call.1}
  #allocation0 [shape = 'u32[]', space=smem, size = 0x4, offset = 0x4, fixed_abs, tag = 'smem constant byte address 0x4 - core index']
  #allocation1 [shape = 'u32[72,128]{1,0:T(1,128)}', space=vmem, size = 0x9000, scoped, tag = 'internal scratch']
  %s0 = inlined_call_operand.vmem [shape: bf16[2,1024], index: 0, kind: input, shape index: {}]
  %s1 = inlined_call_operand.vmem [shape: f32[2,32], index: 1, kind: input, shape index: {}]
  %s2 = inlined_call_operand.vmem [shape: f32[2,16,32], index: 2, kind: input, shape index: {}]
  %s3 = inlined_call_operand.vmem [shape: f32[2,16,32], index: 3, kind: input, shape index: {}]
  %s4 = inlined_call_operand.vmem [shape: bf16[1024,32], index: 4, kind: input, shape index: {}]
  %s5 = inlined_call_operand.vmem [shape: f32[1,32], index: 5, kind: input, shape index: {}]
  %s6 = inlined_call_operand.vmem [shape: f32[32,32], index: 6, kind: input, shape index: {}]
  %s7 = inlined_call_operand.vmem [shape: f32[1,32], index: 7, kind: input, shape index: {}]
  %s8 = inlined_call_operand.vmem [shape: f32[32,32], index: 8, kind: input, shape index: {}]
  %s9 = inlined_call_operand.vmem [shape: f32[1,32], index: 9, kind: input, shape index: {}]
  %s10 = inlined_call_operand.vmem [shape: f32[1,32], index: 10, kind: input, shape index: {}]
  %s11 = inlined_call_operand.vmem [shape: f32[1,32], index: 11, kind: input, shape index: {}]
  %s12 = inlined_call_operand.vmem [shape: f32[32,64], index: 12, kind: input, shape index: {}]
  %s13 = inlined_call_operand.vmem [shape: f32[32,64], index: 13, kind: input, shape index: {}]
  %s14 = inlined_call_operand.vmem [shape: f32[1,64], index: 14, kind: input, shape index: {}]
  %s15 = inlined_call_operand.hbm [shape: f32[2,64], index: 15, kind: output, shape index: {}]
  %s16 = sld [smem:[#allocation0]]
  $region70: #{tpu_custom_call.1} parent=0
    _
  %s18 = ssub.s32 1, %s16
  %s19 = scalar_select 0, %s18, %s16
  $region1: #{tpu_custom_call.1} parent=0
    #allocation2 [shape = 'u8[1024]{0}', space=vmem, size = 0x400, scoped, tag = 'output window, operand 0, single buffered']
    #allocation3 [shape = 's32[1]{0}', space=sflag, size = 0x4, scoped, tag = 'scoped memory for tpu_custom_call.1']
    %20 = vsyncpa [#allocation3], 0
    // Predicated region
    $region2: #{tpu_custom_call.1} parent=1 // pred_check
      _
    $region3: #{tpu_custom_call.1} parent=1 // pred_check_branch
      %22 = sbr.rel (0) target = $region5
    $region4: #{tpu_custom_call.1} parent=1 // pred_region
      _
    $region5: #{tpu_custom_call.1} parent=1 // pred_fallthru
      _
    // Predicated region
    $region6: #{tpu_custom_call.1} parent=1 // pred_check
      _
    $region7: #{tpu_custom_call.1} parent=1 // pred_check_branch
      %24 = sbr.rel (0) target = $region9
    $region8: #{tpu_custom_call.1} parent=1 // pred_region
      _
    $region9: #{tpu_custom_call.1} parent=1 // pred_fallthru
      _
    // Predicated region
    $region10: #{tpu_custom_call.1} parent=1 // pred_check
      _
    $region11: #{tpu_custom_call.1} parent=1 // pred_check_branch
      %26 = sbr.rel (0) target = $region13
    $region12: #{tpu_custom_call.1} parent=1 // pred_region
      _
    $region13: #{tpu_custom_call.1} parent=1 // pred_fallthru
      _
    // Predicated region
    $region14: #{tpu_custom_call.1} parent=1 // pred_check
      _
    $region15: #{tpu_custom_call.1} parent=1 // pred_check_branch
      %28 = sbr.rel (0) target = $region17
    $region16: #{tpu_custom_call.1} parent=1 // pred_region
      _
    $region17: #{tpu_custom_call.1} parent=1 // pred_fallthru
      _
    // Predicated region
    $region18: #{tpu_custom_call.1} parent=1 // pred_check
      _
    $region19: #{tpu_custom_call.1} parent=1 // pred_check_branch
      %30 = sbr.rel (0) target = $region21
    $region20: #{tpu_custom_call.1} parent=1 // pred_region
      _
    $region21: #{tpu_custom_call.1} parent=1 // pred_fallthru
      _
    // Predicated region
    $region22: #{tpu_custom_call.1} parent=1 // pred_check
      _
    $region23: #{tpu_custom_call.1} parent=1 // pred_check_branch
      %32 = sbr.rel (0) target = $region25
    $region24: #{tpu_custom_call.1} parent=1 // pred_region
      _
    $region25: #{tpu_custom_call.1} parent=1 // pred_fallthru
      _
    // Predicated region
    $region26: #{tpu_custom_call.1} parent=1 // pred_check
      _
    $region27: #{tpu_custom_call.1} parent=1 // pred_check_branch
      %34 = sbr.rel (0) target = $region29
    $region28: #{tpu_custom_call.1} parent=1 // pred_region
      _
    $region29: #{tpu_custom_call.1} parent=1 // pred_fallthru
      _
    // Predicated region
    $region30: #{tpu_custom_call.1} parent=1 // pred_check
      _
    $region31: #{tpu_custom_call.1} parent=1 // pred_check_branch
      %36 = sbr.rel (0) target = $region33
    $region32: #{tpu_custom_call.1} parent=1 // pred_region
      _
    $region33: #{tpu_custom_call.1} parent=1 // pred_fallthru
      _
    // Predicated region
    $region34: #{tpu_custom_call.1} parent=1 // pred_check
      _
    $region35: #{tpu_custom_call.1} parent=1 // pred_check_branch
      %38 = sbr.rel (0) target = $region37
    $region36: #{tpu_custom_call.1} parent=1 // pred_region
      _
    $region37: #{tpu_custom_call.1} parent=1 // pred_fallthru
      _
    // Predicated region
    $region38: #{tpu_custom_call.1} parent=1 // pred_check
      _
    $region39: #{tpu_custom_call.1} parent=1 // pred_check_branch
      %40 = sbr.rel (0) target = $region41
    $region40: #{tpu_custom_call.1} parent=1 // pred_region
      _
    $region41: #{tpu_custom_call.1} parent=1 // pred_fallthru
      _
    // Predicated region
    $region42: #{tpu_custom_call.1} parent=1 // pred_check
      _
    $region43: #{tpu_custom_call.1} parent=1 // pred_check_branch
      %42 = sbr.rel (0) target = $region45
    $region44: #{tpu_custom_call.1} parent=1 // pred_region
      _
    $region45: #{tpu_custom_call.1} parent=1 // pred_fallthru
      _
    // Predicated region
    $region46: #{tpu_custom_call.1} parent=1 // pred_check
      _
    $region47: #{tpu_custom_call.1} parent=1 // pred_check_branch
      %44 = sbr.rel (0) target = $region49
    $region48: #{tpu_custom_call.1} parent=1 // pred_region
      _
    $region49: #{tpu_custom_call.1} parent=1 // pred_fallthru
      _
    // Predicated region
    $region50: #{tpu_custom_call.1} parent=1 // pred_check
      _
    $region51: #{tpu_custom_call.1} parent=1 // pred_check_branch
      %46 = sbr.rel (0) target = $region53
    $region52: #{tpu_custom_call.1} parent=1 // pred_region
      _
    $region53: #{tpu_custom_call.1} parent=1 // pred_fallthru
      _
    // Predicated region
    $region54: #{tpu_custom_call.1} parent=1 // pred_check
      _
    $region55: #{tpu_custom_call.1} parent=1 // pred_check_branch
      %48 = sbr.rel (0) target = $region57
    $region56: #{tpu_custom_call.1} parent=1 // pred_region
      _
    $region57: #{tpu_custom_call.1} parent=1 // pred_fallthru
      _
    // Predicated region
    $region58: #{tpu_custom_call.1} parent=1 // pred_check
      _
    $region59: #{tpu_custom_call.1} parent=1 // pred_check_branch
      %50 = sbr.rel (0) target = $region61
    $region60: #{tpu_custom_call.1} parent=1 // pred_region
      _
    $region61: #{tpu_custom_call.1} parent=1 // pred_fallthru
      _
    %v51 = vld [vmem:[%s2] sm:$0xff]
    %v52 = vld [vmem:[%s2 + $0x8] sm:$0xff]
    %v53 = vld [vmem:[%s2 + $0x10] sm:$0xff]
    %v54 = vld [vmem:[%s2 + $0x18] sm:$0xff]
    %v55 = vld [vmem:[%s3] sm:$0xff]
    %v56 = vld [vmem:[%s3 + $0x8] sm:$0xff]
    %v57 = vld [vmem:[%s3 + $0x10] sm:$0xff]
    %v58 = vld [vmem:[%s3 + $0x18] sm:$0xff]
    %v59 = vld [vmem:[%s0] sm:$0xff]
    %v60 = vld [vmem:[%s4] sm:$0xf]
    %v61 = vld [vmem:[%s4 + $0x4] sm:$0xf]
    %v62 = vld [vmem:[%s4 + $0x8] sm:$0xf]
    %v63 = vld [vmem:[%s4 + $0xc] sm:$0xf]
    %v64 = vld [vmem:[%s4 + $0x10] sm:$0xf]
    %v65 = vld [vmem:[%s4 + $0x14] sm:$0xf]
    %v66 = vld [vmem:[%s4 + $0x18] sm:$0xf]
    %v67 = vld [vmem:[%s4 + $0x1c] sm:$0xf]
    %v68 = vld [vmem:[%s4 + $0x20] sm:$0xf]
    %v69 = vld [vmem:[%s4 + $0x24] sm:$0xf]
    %v70 = vld [vmem:[%s4 + $0x28] sm:$0xf]
    %v71 = vld [vmem:[%s4 + $0x2c] sm:$0xf]
    %v72 = vld [vmem:[%s4 + $0x30] sm:$0xf]
    %v73 = vld [vmem:[%s4 + $0x34] sm:$0xf]
    %v74 = vld [vmem:[%s4 + $0x38] sm:$0xf]
    %v75 = vld [vmem:[%s4 + $0x3c] sm:$0xf]
    %v76 = vld [vmem:[%s4 + $0x40] sm:$0xf]
    %v77 = vld [vmem:[%s4 + $0x44] sm:$0xf]
    %v78 = vld [vmem:[%s4 + $0x48] sm:$0xf]
    %v79 = vld [vmem:[%s4 + $0x4c] sm:$0xf]
    %v80 = vld [vmem:[%s4 + $0x50] sm:$0xf]
    %v81 = vld [vmem:[%s4 + $0x54] sm:$0xf]
    %v82 = vld [vmem:[%s4 + $0x58] sm:$0xf]
    %v83 = vld [vmem:[%s4 + $0x5c] sm:$0xf]
    %v84 = vld [vmem:[%s4 + $0x60] sm:$0xf]
    %v85 = vld [vmem:[%s4 + $0x64] sm:$0xf]
    %v86 = vld [vmem:[%s4 + $0x68] sm:$0xf]
    %v87 = vld [vmem:[%s4 + $0x6c] sm:$0xf]
    %v88 = vld [vmem:[%s4 + $0x70] sm:$0xf]
    %v89 = vld [vmem:[%s4 + $0x74] sm:$0xf]
    %v90 = vld [vmem:[%s4 + $0x78] sm:$0xf]
    %v91 = vld [vmem:[%s4 + $0x7c] sm:$0xf]
    %v92 = vld [vmem:[%s4 + $0x80] sm:$0xf]
    %v93 = vld [vmem:[%s4 + $0x84] sm:$0xf]
    %v94 = vld [vmem:[%s4 + $0x88] sm:$0xf]
    %v95 = vld [vmem:[%s4 + $0x8c] sm:$0xf]
    %v96 = vld [vmem:[%s4 + $0x90] sm:$0xf]
    %v97 = vld [vmem:[%s4 + $0x94] sm:$0xf]
    %v98 = vld [vmem:[%s4 + $0x98] sm:$0xf]
    %v99 = vld [vmem:[%s4 + $0x9c] sm:$0xf]
    %v100 = vld [vmem:[%s4 + $0xa0] sm:$0xf]
    %v101 = vld [vmem:[%s4 + $0xa4] sm:$0xf]
    %v102 = vld [vmem:[%s4 + $0xa8] sm:$0xf]
    %v103 = vld [vmem:[%s4 + $0xac] sm:$0xf]
    %v104 = vld [vmem:[%s4 + $0xb0] sm:$0xf]
    %v105 = vld [vmem:[%s4 + $0xb4] sm:$0xf]
    %v106 = vld [vmem:[%s4 + $0xb8] sm:$0xf]
    %v107 = vld [vmem:[%s4 + $0xbc] sm:$0xf]
    %v108 = vld [vmem:[%s4 + $0xc0] sm:$0xf]
    %v109 = vld [vmem:[%s4 + $0xc4] sm:$0xf]
    %v110 = vld [vmem:[%s4 + $0xc8] sm:$0xf]
    %v111 = vld [vmem:[%s4 + $0xcc] sm:$0xf]
    %v112 = vld [vmem:[%s4 + $0xd0] sm:$0xf]
    %v113 = vld [vmem:[%s4 + $0xd4] sm:$0xf]
    %v114 = vld [vmem:[%s4 + $0xd8] sm:$0xf]
    %v115 = vld [vmem:[%s4 + $0xdc] sm:$0xf]
    %v116 = vld [vmem:[%s4 + $0xe0] sm:$0xf]
    %v117 = vld [vmem:[%s4 + $0xe4] sm:$0xf]
    %v118 = vld [vmem:[%s4 + $0xe8] sm:$0xf]
    %v119 = vld [vmem:[%s4 + $0xec] sm:$0xf]
    %v120 = vld [vmem:[%s4 + $0xf0] sm:$0xf]
    %v121 = vld [vmem:[%s4 + $0xf4] sm:$0xf]
    %v122 = vld [vmem:[%s4 + $0xf8] sm:$0xf]
    %v123 = vld [vmem:[%s4 + $0xfc] sm:$0xf]
    %v124 = vld [vmem:[%s4 + $0x100] sm:$0xf]
    %v125 = vld [vmem:[%s4 + $0x104] sm:$0xf]
    %v126 = vld [vmem:[%s4 + $0x108] sm:$0xf]
    %v127 = vld [vmem:[%s4 + $0x10c] sm:$0xf]
    %v128 = vld [vmem:[%s4 + $0x110] sm:$0xf]
    %v129 = vld [vmem:[%s4 + $0x114] sm:$0xf]
    %v130 = vld [vmem:[%s4 + $0x118] sm:$0xf]
    %v131 = vld [vmem:[%s4 + $0x11c] sm:$0xf]
    %v132 = vld [vmem:[%s4 + $0x120] sm:$0xf]
    %v133 = vld [vmem:[%s4 + $0x124] sm:$0xf]
    %v134 = vld [vmem:[%s4 + $0x128] sm:$0xf]
    %v135 = vld [vmem:[%s4 + $0x12c] sm:$0xf]
    %v136 = vld [vmem:[%s4 + $0x130] sm:$0xf]
    %v137 = vld [vmem:[%s4 + $0x134] sm:$0xf]
    %v138 = vld [vmem:[%s4 + $0x138] sm:$0xf]
    %v139 = vld [vmem:[%s4 + $0x13c] sm:$0xf]
    %v140 = vld [vmem:[%s4 + $0x140] sm:$0xf]
    %v141 = vld [vmem:[%s4 + $0x144] sm:$0xf]
    %v142 = vld [vmem:[%s4 + $0x148] sm:$0xf]
    %v143 = vld [vmem:[%s4 + $0x14c] sm:$0xf]
    %v144 = vld [vmem:[%s4 + $0x150] sm:$0xf]
    %v145 = vld [vmem:[%s4 + $0x154] sm:$0xf]
    %v146 = vld [vmem:[%s4 + $0x158] sm:$0xf]
    %v147 = vld [vmem:[%s4 + $0x15c] sm:$0xf]
    %v148 = vld [vmem:[%s4 + $0x160] sm:$0xf]
    %v149 = vld [vmem:[%s4 + $0x164] sm:$0xf]
    %v150 = vld [vmem:[%s4 + $0x168] sm:$0xf]
    %v151 = vld [vmem:[%s4 + $0x16c] sm:$0xf]
    %v152 = vld [vmem:[%s4 + $0x170] sm:$0xf]
    %v153 = vld [vmem:[%s4 + $0x174] sm:$0xf]
    %v154 = vld [vmem:[%s4 + $0x178] sm:$0xf]
    %v155 = vld [vmem:[%s4 + $0x17c] sm:$0xf]
    %v156 = vld [vmem:[%s4 + $0x180] sm:$0xf]
    %v157 = vld [vmem:[%s4 + $0x184] sm:$0xf]
    %v158 = vld [vmem:[%s4 + $0x188] sm:$0xf]
    %v159 = vld [vmem:[%s4 + $0x18c] sm:$0xf]
    %v160 = vld [vmem:[%s4 + $0x190] sm:$0xf]
    %v161 = vld [vmem:[%s4 + $0x194] sm:$0xf]
    %v162 = vld [vmem:[%s4 + $0x198] sm:$0xf]
    %v163 = vld [vmem:[%s4 + $0x19c] sm:$0xf]
    %v164 = vld [vmem:[%s4 + $0x1a0] sm:$0xf]
    %v165 = vld [vmem:[%s4 + $0x1a4] sm:$0xf]
    %v166 = vld [vmem:[%s4 + $0x1a8] sm:$0xf]
    %v167 = vld [vmem:[%s4 + $0x1ac] sm:$0xf]
    %v168 = vld [vmem:[%s4 + $0x1b0] sm:$0xf]
    %v169 = vld [vmem:[%s4 + $0x1b4] sm:$0xf]
    %v170 = vld [vmem:[%s4 + $0x1b8] sm:$0xf]
    %v171 = vld [vmem:[%s4 + $0x1bc] sm:$0xf]
    %v172 = vld [vmem:[%s4 + $0x1c0] sm:$0xf]
    %v173 = vld [vmem:[%s4 + $0x1c4] sm:$0xf]
    %v174 = vld [vmem:[%s4 + $0x1c8] sm:$0xf]
    %v175 = vld [vmem:[%s4 + $0x1cc] sm:$0xf]
    %v176 = vld [vmem:[%s4 + $0x1d0] sm:$0xf]
    %v177 = vld [vmem:[%s4 + $0x1d4] sm:$0xf]
    %v178 = vld [vmem:[%s4 + $0x1d8] sm:$0xf]
    %v179 = vld [vmem:[%s4 + $0x1dc] sm:$0xf]
    %v180 = vld [vmem:[%s4 + $0x1e0] sm:$0xf]
    %v181 = vld [vmem:[%s4 + $0x1e4] sm:$0xf]
    %v182 = vld [vmem:[%s4 + $0x1e8] sm:$0xf]
    %v183 = vld [vmem:[%s4 + $0x1ec] sm:$0xf]
    %v184 = vld [vmem:[%s4 + $0x1f0] sm:$0xf]
    %v185 = vld [vmem:[%s4 + $0x1f4] sm:$0xf]
    %v186 = vld [vmem:[%s4 + $0x1f8] sm:$0xf]
    %v187 = vld [vmem:[%s4 + $0x1fc] sm:$0xf]
    %v188 = vld [vmem:[%s5] sm:$0x1]
    %v190 = vperm.slane %v188, 0
    %193 = vst [vmem:[#allocation1] ss:$9 sm:$0xff] %v59
    %v194 = vld [vmem:[#allocation1] sm:$0xff]
    %v195 = vld [vmem:[#allocation1 + $0x9] sm:$0xff]
    %v196 = vld [vmem:[#allocation1 + $0x12] sm:$0xff]
    %v197 = vld [vmem:[#allocation1 + $0x1b] sm:$0xff]
    %v198 = vld [vmem:[#allocation1 + $0x24] sm:$0xff]
    %v199 = vld [vmem:[#allocation1 + $0x2d] sm:$0xff]
    %v200 = vld [vmem:[#allocation1 + $0x36] sm:$0xff]
    %v201 = vld [vmem:[#allocation1 + $0x3f] sm:$0xff]
    %v338 = vunpack.c.l.b16 %v60
    %v339 = vunpack.c.l.b16 %v61
    %v340 = vunpack.c.l.b16 %v62
    %v341 = vunpack.c.l.b16 %v63
    %v342 = vunpack.c.l.b16 %v64
    %v343 = vunpack.c.l.b16 %v65
    %v344 = vunpack.c.l.b16 %v66
    %v345 = vunpack.c.l.b16 %v67
    %v346 = vunpack.c.l.b16 %v68
    %v347 = vunpack.c.l.b16 %v69
    %v348 = vunpack.c.l.b16 %v70
    %v349 = vunpack.c.l.b16 %v71
    %v350 = vunpack.c.l.b16 %v72
    %v351 = vunpack.c.l.b16 %v73
    %v352 = vunpack.c.l.b16 %v74
    %v353 = vunpack.c.l.b16 %v75
    %v354 = vunpack.c.l.b16 %v76
    %v355 = vunpack.c.l.b16 %v77
    %v356 = vunpack.c.l.b16 %v78
    %v357 = vunpack.c.l.b16 %v79
    %v358 = vunpack.c.l.b16 %v80
    %v359 = vunpack.c.l.b16 %v81
    %v360 = vunpack.c.l.b16 %v82
    %v361 = vunpack.c.l.b16 %v83
    %v362 = vunpack.c.l.b16 %v84
    %v363 = vunpack.c.l.b16 %v85
    %v364 = vunpack.c.l.b16 %v86
    %v365 = vunpack.c.l.b16 %v87
    %v366 = vunpack.c.l.b16 %v88
    %v367 = vunpack.c.l.b16 %v89
    %v368 = vunpack.c.l.b16 %v90
    %v369 = vunpack.c.l.b16 %v91
    %v370 = vunpack.c.l.b16 %v92
    %v371 = vunpack.c.l.b16 %v93
    %v372 = vunpack.c.l.b16 %v94
    %v373 = vunpack.c.l.b16 %v95
    %v374 = vunpack.c.l.b16 %v96
    %v375 = vunpack.c.l.b16 %v97
    %v376 = vunpack.c.l.b16 %v98
    %v377 = vunpack.c.l.b16 %v99
    %v378 = vunpack.c.l.b16 %v100
    %v379 = vunpack.c.l.b16 %v101
    %v380 = vunpack.c.l.b16 %v102
    %v381 = vunpack.c.l.b16 %v103
    %v382 = vunpack.c.l.b16 %v104
    %v383 = vunpack.c.l.b16 %v105
    %v384 = vunpack.c.l.b16 %v106
    %v385 = vunpack.c.l.b16 %v107
    %v386 = vunpack.c.l.b16 %v108
    %v387 = vunpack.c.l.b16 %v109
    %v388 = vunpack.c.l.b16 %v110
    %v389 = vunpack.c.l.b16 %v111
    %v390 = vunpack.c.l.b16 %v112
    %v391 = vunpack.c.l.b16 %v113
    %v392 = vunpack.c.l.b16 %v114
    %v393 = vunpack.c.l.b16 %v115
    %v394 = vunpack.c.l.b16 %v116
    %v395 = vunpack.c.l.b16 %v117
    %v396 = vunpack.c.l.b16 %v118
    %v397 = vunpack.c.l.b16 %v119
    %v398 = vunpack.c.l.b16 %v120
    %v399 = vunpack.c.l.b16 %v121
    %v400 = vunpack.c.l.b16 %v122
    %v401 = vunpack.c.l.b16 %v123
    %v402 = vunpack.c.l.b16 %v124
    %v403 = vunpack.c.l.b16 %v125
    %v404 = vunpack.c.l.b16 %v126
    %v405 = vunpack.c.l.b16 %v127
    %v406 = vunpack.c.l.b16 %v128
    %v407 = vunpack.c.l.b16 %v129
    %v408 = vunpack.c.l.b16 %v130
    %v409 = vunpack.c.l.b16 %v131
    %v410 = vunpack.c.l.b16 %v132
    %v411 = vunpack.c.l.b16 %v133
    %v412 = vunpack.c.l.b16 %v134
    %v413 = vunpack.c.l.b16 %v135
    %v414 = vunpack.c.l.b16 %v136
    %v415 = vunpack.c.l.b16 %v137
    %v416 = vunpack.c.l.b16 %v138
    %v417 = vunpack.c.l.b16 %v139
    %v418 = vunpack.c.l.b16 %v140
    %v419 = vunpack.c.l.b16 %v141
    %v420 = vunpack.c.l.b16 %v142
    %v421 = vunpack.c.l.b16 %v143
    %v422 = vunpack.c.l.b16 %v144
    %v423 = vunpack.c.l.b16 %v145
    %v424 = vunpack.c.l.b16 %v146
    %v425 = vunpack.c.l.b16 %v147
    %v426 = vunpack.c.l.b16 %v148
    %v427 = vunpack.c.l.b16 %v149
    %v428 = vunpack.c.l.b16 %v150
    %v429 = vunpack.c.l.b16 %v151
    %v430 = vunpack.c.l.b16 %v152
    %v431 = vunpack.c.l.b16 %v153
    %v432 = vunpack.c.l.b16 %v154
    %v433 = vunpack.c.l.b16 %v155
    %v434 = vunpack.c.l.b16 %v156
    %v435 = vunpack.c.l.b16 %v157
    %v436 = vunpack.c.l.b16 %v158
    %v437 = vunpack.c.l.b16 %v159
    %v438 = vunpack.c.l.b16 %v160
    %v439 = vunpack.c.l.b16 %v161
    %v440 = vunpack.c.l.b16 %v162
    %v441 = vunpack.c.l.b16 %v163
    %v442 = vunpack.c.l.b16 %v164
    %v443 = vunpack.c.l.b16 %v165
    %v444 = vunpack.c.l.b16 %v166
    %v445 = vunpack.c.l.b16 %v167
    %v446 = vunpack.c.l.b16 %v168
    %v447 = vunpack.c.l.b16 %v169
    %v448 = vunpack.c.l.b16 %v170
    %v449 = vunpack.c.l.b16 %v171
    %v450 = vunpack.c.l.b16 %v172
    %v451 = vunpack.c.l.b16 %v173
    %v452 = vunpack.c.l.b16 %v174
    %v453 = vunpack.c.l.b16 %v175
    %v454 = vunpack.c.l.b16 %v176
    %v455 = vunpack.c.l.b16 %v177
    %v456 = vunpack.c.l.b16 %v178
    %v457 = vunpack.c.l.b16 %v179
    %v458 = vunpack.c.l.b16 %v180
    %v459 = vunpack.c.l.b16 %v181
    %v460 = vunpack.c.l.b16 %v182
    %v461 = vunpack.c.l.b16 %v183
    %v462 = vunpack.c.l.b16 %v184
    %v463 = vunpack.c.l.b16 %v185
    %v464 = vunpack.c.l.b16 %v186
    %v465 = vunpack.c.l.b16 %v187
    %v466 = vpack.c.b16 %v339, %v338
    %v467 = vpack.c.b16 %v341, %v340
    %v468 = vpack.c.b16 %v343, %v342
    %v469 = vpack.c.b16 %v345, %v344
    %v470 = vpack.c.b16 %v347, %v346
    %v471 = vpack.c.b16 %v349, %v348
    %v472 = vpack.c.b16 %v351, %v350
    %v473 = vpack.c.b16 %v353, %v352
    %v474 = vpack.c.b16 %v355, %v354
    %v475 = vpack.c.b16 %v357, %v356
    %v476 = vpack.c.b16 %v359, %v358
    %v477 = vpack.c.b16 %v361, %v360
    %v478 = vpack.c.b16 %v363, %v362
    %v479 = vpack.c.b16 %v365, %v364
    %v480 = vpack.c.b16 %v367, %v366
    %v481 = vpack.c.b16 %v369, %v368
    %v482 = vpack.c.b16 %v371, %v370
    %v483 = vpack.c.b16 %v373, %v372
    %v484 = vpack.c.b16 %v375, %v374
    %v485 = vpack.c.b16 %v377, %v376
    %v486 = vpack.c.b16 %v379, %v378
    %v487 = vpack.c.b16 %v381, %v380
    %v488 = vpack.c.b16 %v383, %v382
    %v489 = vpack.c.b16 %v385, %v384
    %v490 = vpack.c.b16 %v387, %v386
    %v491 = vpack.c.b16 %v389, %v388
    %v492 = vpack.c.b16 %v391, %v390
    %v493 = vpack.c.b16 %v393, %v392
    %v494 = vpack.c.b16 %v395, %v394
    %v495 = vpack.c.b16 %v397, %v396
    %v496 = vpack.c.b16 %v399, %v398
    %v497 = vpack.c.b16 %v401, %v400
    %v498 = vpack.c.b16 %v403, %v402
    %v499 = vpack.c.b16 %v405, %v404
    %v500 = vpack.c.b16 %v407, %v406
    %v501 = vpack.c.b16 %v409, %v408
    %v502 = vpack.c.b16 %v411, %v410
    %v503 = vpack.c.b16 %v413, %v412
    %v504 = vpack.c.b16 %v415, %v414
    %v505 = vpack.c.b16 %v417, %v416
    %v506 = vpack.c.b16 %v419, %v418
    %v507 = vpack.c.b16 %v421, %v420
    %v508 = vpack.c.b16 %v423, %v422
    %v509 = vpack.c.b16 %v425, %v424
    %v510 = vpack.c.b16 %v427, %v426
    %v511 = vpack.c.b16 %v429, %v428
    %v512 = vpack.c.b16 %v431, %v430
    %v513 = vpack.c.b16 %v433, %v432
    %v514 = vpack.c.b16 %v435, %v434
    %v515 = vpack.c.b16 %v437, %v436
    %v516 = vpack.c.b16 %v439, %v438
    %v517 = vpack.c.b16 %v441, %v440
    %v518 = vpack.c.b16 %v443, %v442
    %v519 = vpack.c.b16 %v445, %v444
    %v520 = vpack.c.b16 %v447, %v446
    %v521 = vpack.c.b16 %v449, %v448
    %v522 = vpack.c.b16 %v451, %v450
    %v523 = vpack.c.b16 %v453, %v452
    %v524 = vpack.c.b16 %v455, %v454
    %v525 = vpack.c.b16 %v457, %v456
    %v526 = vpack.c.b16 %v459, %v458
    %v527 = vpack.c.b16 %v461, %v460
    %v528 = vpack.c.b16 %v463, %v462
    %v529 = vpack.c.b16 %v465, %v464
    %594 = vmatpush.bf16.msra.mxu0 %v473
    %595 = vmatpush.bf16.msra.mxu0 %v472
    %596 = vmatpush.bf16.msra.mxu0 %v471
    %597 = vmatpush.bf16.msra.mxu0 %v470
    %598 = vmatpush.bf16.msra.mxu0 %v469
    %599 = vmatpush.bf16.msra.mxu0 %v468
    %600 = vmatpush.bf16.msra.mxu0 %v467
    %601 = vmatpush.bf16.msra.mxu0 %v466
    %602 = vmatmul.bf16.gmra.mxu0 %v194
    %v603 = vpop.f32.mrf.mxu0
    %v604 = vadd.f32 %v190, %v603
    %v605 = vpop.f32.mrf.mxu0
    %606 = vdwg.mxu0
    %607 = vmatpush.bf16.msra.mxu0 %v481
    %608 = vmatpush.bf16.msra.mxu0 %v480
    %609 = vmatpush.bf16.msra.mxu0 %v479
    %610 = vmatpush.bf16.msra.mxu0 %v478
    %611 = vmatpush.bf16.msra.mxu0 %v477
    %612 = vmatpush.bf16.msra.mxu0 %v476
    %613 = vmatpush.bf16.msra.mxu0 %v475
    %614 = vmatpush.bf16.msra.mxu0 %v474
    %615 = vmatmul.bf16.gmra.mxu0 %v195
    %v616 = vpop.f32.mrf.mxu0
    %v617 = vadd.f32 %v604, %v616
    %v618 = vpop.f32.mrf.mxu0
    %619 = vdwg.mxu0
    %620 = vmatpush.bf16.msra.mxu0 %v489
    %621 = vmatpush.bf16.msra.mxu0 %v488
    %622 = vmatpush.bf16.msra.mxu0 %v487
    %623 = vmatpush.bf16.msra.mxu0 %v486
    %624 = vmatpush.bf16.msra.mxu0 %v485
    %625 = vmatpush.bf16.msra.mxu0 %v484
    %626 = vmatpush.bf16.msra.mxu0 %v483
    %627 = vmatpush.bf16.msra.mxu0 %v482
    %628 = vmatmul.bf16.gmra.mxu0 %v196
    %v629 = vpop.f32.mrf.mxu0
    %v630 = vadd.f32 %v617, %v629
    %v631 = vpop.f32.mrf.mxu0
    %632 = vdwg.mxu0
    %633 = vmatpush.bf16.msra.mxu0 %v497
    %634 = vmatpush.bf16.msra.mxu0 %v496
    %635 = vmatpush.bf16.msra.mxu0 %v495
    %636 = vmatpush.bf16.msra.mxu0 %v494
    %637 = vmatpush.bf16.msra.mxu0 %v493
    %638 = vmatpush.bf16.msra.mxu0 %v492
    %639 = vmatpush.bf16.msra.mxu0 %v491
    %640 = vmatpush.bf16.msra.mxu0 %v490
    %641 = vmatmul.bf16.gmra.mxu0 %v197
    %v642 = vpop.f32.mrf.mxu0
    %v643 = vadd.f32 %v630, %v642
    %v644 = vpop.f32.mrf.mxu0
    %645 = vdwg.mxu0
    %646 = vmatpush.bf16.msra.mxu0 %v505
    %647 = vmatpush.bf16.msra.mxu0 %v504
    %648 = vmatpush.bf16.msra.mxu0 %v503
    %649 = vmatpush.bf16.msra.mxu0 %v502
    %650 = vmatpush.bf16.msra.mxu0 %v501
    %651 = vmatpush.bf16.msra.mxu0 %v500
    %652 = vmatpush.bf16.msra.mxu0 %v499
    %653 = vmatpush.bf16.msra.mxu0 %v498
    %654 = vmatmul.bf16.gmra.mxu0 %v198
    %v655 = vpop.f32.mrf.mxu0
    %v656 = vadd.f32 %v643, %v655
    %v657 = vpop.f32.mrf.mxu0
    %658 = vdwg.mxu0
    %659 = vmatpush.bf16.msra.mxu0 %v513
    %660 = vmatpush.bf16.msra.mxu0 %v512
    %661 = vmatpush.bf16.msra.mxu0 %v511
    %662 = vmatpush.bf16.msra.mxu0 %v510
    %663 = vmatpush.bf16.msra.mxu0 %v509
    %664 = vmatpush.bf16.msra.mxu0 %v508
    %665 = vmatpush.bf16.msra.mxu0 %v507
    %666 = vmatpush.bf16.msra.mxu0 %v506
    %667 = vmatmul.bf16.gmra.mxu0 %v199
    %v668 = vpop.f32.mrf.mxu0
    %v669 = vadd.f32 %v656, %v668
    %v670 = vpop.f32.mrf.mxu0
    %671 = vdwg.mxu0
    %672 = vmatpush.bf16.msra.mxu0 %v521
    %673 = vmatpush.bf16.msra.mxu0 %v520
    %674 = vmatpush.bf16.msra.mxu0 %v519
    %675 = vmatpush.bf16.msra.mxu0 %v518
    %676 = vmatpush.bf16.msra.mxu0 %v517
    %677 = vmatpush.bf16.msra.mxu0 %v516
    %678 = vmatpush.bf16.msra.mxu0 %v515
    %679 = vmatpush.bf16.msra.mxu0 %v514
    %680 = vmatmul.bf16.gmra.mxu0 %v200
    %v681 = vpop.f32.mrf.mxu0
    %v682 = vadd.f32 %v669, %v681
    %v683 = vpop.f32.mrf.mxu0
    %684 = vdwg.mxu0
    %685 = vmatpush.bf16.msra.mxu0 %v529
    %686 = vmatpush.bf16.msra.mxu0 %v528
    %687 = vmatpush.bf16.msra.mxu0 %v527
    %688 = vmatpush.bf16.msra.mxu0 %v526
    %689 = vmatpush.bf16.msra.mxu0 %v525
    %690 = vmatpush.bf16.msra.mxu0 %v524
    %691 = vmatpush.bf16.msra.mxu0 %v523
    %692 = vmatpush.bf16.msra.mxu0 %v522
    %693 = vmatmul.bf16.gmra.mxu0 %v201
    %v694 = vpop.f32.mrf.mxu0
    %v695 = vadd.f32 %v682, %v694
    %v696 = vpop.f32.mrf.mxu0
    %697 = vdwg.mxu0
    %v699 = vrot.slane %v695, 1
    %v700 = vperm.slane %v695, 0
    %v701 = vperm.slane %v699, 0
    %v704 = vmul.f32 %v51, %v700
    %v705 = vmul.f32 %v52, %v700
    %v706 = vmul.f32 %v53, %v701
    %v707 = vmul.f32 %v54, %v701
    %vm708 = vcmask 261120
    %v709 = vsel %vm708, %v704, -inf
    %v710 = vsel %vm708, %v705, -inf
    %v711 = vmax.f32 %v709, %v710
    %v712 = vrot.slane %v711, 4
    %v713 = vmax.f32 %v711, %v712
    %v714 = vrot.slane %v713, 2
    %v715 = vmax.f32 %v713, %v714
    %v716 = vrot.slane %v715, 1
    %v717 = vmax.f32 %v715, %v716
    %v718 = vsel %vm708, %v706, -inf
    %v719 = vsel %vm708, %v707, -inf
    %v720 = vmax.f32 %v718, %v719
    %v721 = vrot.slane %v720, 4
    %v722 = vmax.f32 %v720, %v721
    %v723 = vrot.slane %v722, 2
    %v724 = vmax.f32 %v722, %v723
    %v725 = vrot.slane %v724, 1
    %v726 = vmax.f32 %v724, %v725
    %v727 = vsub.f32 %v704, %v717
    %v728 = vsub.f32 %v705, %v717
    %v729 = vsub.f32 %v706, %v726
    %v730 = vsub.f32 %v707, %v726
    %v731 = vmul.f32 %v727, 1.442695
    %v732 = vpow.pop %v731
    %v733 = vmul.f32 %v728, 1.442695
    %v734 = vpow.pop %v733
    %v735 = vmul.f32 %v729, 1.442695
    %v736 = vpow.pop %v735
    %v737 = vmul.f32 %v730, 1.442695
    %v738 = vpow.pop %v737
    %v739 = vsel %vm708, %v732, 0.0
    %v740 = vsel %vm708, %v734, 0.0
    %v741 = vadd.f32 %v739, %v740
    %v742 = vrot.slane %v741, 4
    %v743 = vadd.f32 %v741, %v742
    %v744 = vrot.slane %v743, 2
    %v745 = vadd.f32 %v743, %v744
    %v746 = vrot.slane %v745, 1
    %v747 = vadd.f32 %v745, %v746
    %v748 = vsel %vm708, %v736, 0.0
    %v749 = vsel %vm708, %v738, 0.0
    %v750 = vadd.f32 %v748, %v749
    %v751 = vrot.slane %v750, 4
    %v752 = vadd.f32 %v750, %v751
    %v753 = vrot.slane %v752, 2
    %v754 = vadd.f32 %v752, %v753
    %v755 = vrot.slane %v754, 1
    %v756 = vadd.f32 %v754, %v755
    %v757 = vrcp.pop %v747
    %v758 = vrcp.pop %v756
    %v759 = vmul.f32 %v732, %v757
    %v760 = vmul.f32 %v734, %v757
    %v761 = vmul.f32 %v736, %v758
    %v762 = vmul.f32 %v738, %v758
    %v763 = vmul.f32 %v51, %v759
    %v764 = vmul.f32 %v52, %v760
    %v765 = vmul.f32 %v53, %v761
    %v766 = vmul.f32 %v54, %v762
    %v767 = vadd.f32 %v763, %v51
    %v768 = vadd.f32 %v764, %v52
    %v769 = vadd.f32 %v765, %v53
    %v770 = vadd.f32 %v766, %v54
    %v771 = vsel %vm708, %v767, 0.0
    %v772 = vsel %vm708, %v768, 0.0
    %v773 = vadd.f32 %v771, %v772
    %v774 = vrot.slane %v773, 4
    %v775 = vadd.f32 %v773, %v774
    %v776 = vrot.slane %v775, 2
    %v777 = vadd.f32 %v775, %v776
    %v778 = vrot.slane %v777, 1
    %v779 = vadd.f32 %v777, %v778
    %v780 = vsel %vm708, %v769, 0.0
    %v781 = vsel %vm708, %v770, 0.0
    %v782 = vadd.f32 %v780, %v781
    %v783 = vrot.slane %v782, 4
    %v784 = vadd.f32 %v782, %v783
    %v785 = vrot.slane %v784, 2
    %v786 = vadd.f32 %v784, %v785
    %v787 = vrot.slane %v786, 1
    %v788 = vadd.f32 %v786, %v787
    %v789 = vrcp.pop 16.0
    %v790 = vmul.f32 16.0, %v789
    %v791 = vsub.f32 1.0, %v790
    %v792 = vmul.f32 %v789, %v791
    %v793 = vadd.f32 %v789, %v792
    %vm794 = vweird.f32 %v789
    %v795 = vsel %vm794, %v789, %v793
    %v796 = vmul.f32 %v779, %v795
    %v797 = vmul.f32 %v788, %v795
    %v798 = vld [vmem:[%s1] sm:$0x3]
    %v799 = vld [vmem:[%s6] sm:$0xff]
    %v800 = vld [vmem:[%s6 + $0x8] sm:$0xff]
    %v801 = vld [vmem:[%s6 + $0x10] sm:$0xff]
    %v802 = vld [vmem:[%s6 + $0x18] sm:$0xff]
    %v803 = vld [vmem:[%s7] sm:$0x1]
    %v805 = vperm.slane %v803, 0
    %v808 = vsel %vm708, %v798, 0
    %810 = vmatpush.msra.mxu0 0.0
    %811 = vmatpush.msra.mxu0 0.0
    %812 = vmatpush.msra.mxu0 0.0
    %813 = vmatpush.msra.mxu0 0.0
    %814 = vmatpush.msra.mxu0 0.0
    %815 = vmatpush.msra.mxu0 0.0
    %816 = vmatpush.msra.mxu0 0.0
    %817 = vmatpush.msra.mxu0 0.0
    %818 = vmatpush.msra.mxu0 0.0
    %819 = vmatpush.msra.mxu0 0.0
    %820 = vmatpush.msra.mxu0 0.0
    %821 = vmatpush.msra.mxu0 0.0
    %822 = vmatpush.msra.mxu0 %v802
    %823 = vmatpush.msra.mxu0 %v801
    %824 = vmatpush.msra.mxu0 %v800
    %825 = vmatpush.msra.mxu0 %v799
    %826 = vmatmul.f32.gmra.mxu0 %v808
    %v827 = vpop.f32.mrf.mxu0
    %v828 = vadd.f32 %v805, %v827
    %829 = vdwg.mxu0
    %v830 = vld [vmem:[%s8] sm:$0xff]
    %v831 = vld [vmem:[%s8 + $0x8] sm:$0xff]
    %v832 = vld [vmem:[%s8 + $0x10] sm:$0xff]
    %v833 = vld [vmem:[%s8 + $0x18] sm:$0xff]
    %v834 = vld [vmem:[%s9] sm:$0x1]
    %v836 = vperm.slane %v834, 0
    %v839 = vsel %vm708, %v828, 0
    %841 = vmatpush.msra.mxu0 0.0
    %842 = vmatpush.msra.mxu0 0.0
    %843 = vmatpush.msra.mxu0 0.0
    %844 = vmatpush.msra.mxu0 0.0
    %845 = vmatpush.msra.mxu0 0.0
    %846 = vmatpush.msra.mxu0 0.0
    %847 = vmatpush.msra.mxu0 0.0
    %848 = vmatpush.msra.mxu0 0.0
    %849 = vmatpush.msra.mxu0 0.0
    %850 = vmatpush.msra.mxu0 0.0
    %851 = vmatpush.msra.mxu0 0.0
    %852 = vmatpush.msra.mxu0 0.0
    %853 = vmatpush.msra.mxu0 %v833
    %854 = vmatpush.msra.mxu0 %v832
    %855 = vmatpush.msra.mxu0 %v831
    %856 = vmatpush.msra.mxu0 %v830
    %857 = vmatmul.f32.gmra.mxu0 %v839
    %v858 = vpop.f32.mrf.mxu0
    %v859 = vadd.f32 %v836, %v858
    %860 = vdwg.mxu0
    %v862 = vrot.slane %v859, 1
    %v863 = vperm.slane %v859, 0
    %v864 = vperm.slane %v862, 0
    %v867 = vadd.f32 %v55, %v863
    %v868 = vadd.f32 %v56, %v863
    %v869 = vadd.f32 %v57, %v864
    %v870 = vadd.f32 %v58, %v864
    %v871 = vsel %vm708, %v867, 0.0
    %872 = vadd.xlane.f32.xlu0 %v871
    %v873 = vpop.xlane.xlu0 %872
    %v874 = vsel %vm708, %v868, 0.0
    %875 = vadd.xlane.f32.xlu0 %v874
    %v876 = vpop.xlane.xlu0 %875
    %v877 = vsel %vm708, %v869, 0.0
    %878 = vadd.xlane.f32.xlu0 %v877
    %v879 = vpop.xlane.xlu0 %878
    %v880 = vsel %vm708, %v870, 0.0
    %881 = vadd.xlane.f32.xlu0 %v880
    %v882 = vpop.xlane.xlu0 %881
    %v883 = vrcp.pop 32.0
    %v884 = vmul.f32 32.0, %v883
    %v885 = vsub.f32 1.0, %v884
    %v886 = vmul.f32 %v883, %v885
    %v887 = vadd.f32 %v883, %v886
    %vm888 = vweird.f32 %v883
    %v889 = vsel %vm888, %v883, %v887
    %v890 = vmul.f32 %v873, %v889
    %v891 = vmul.f32 %v876, %v889
    %v892 = vmul.f32 %v879, %v889
    %v893 = vmul.f32 %v882, %v889
    %v894 = vsub.f32 %v867, %v890
    %v895 = vsub.f32 %v868, %v891
    %v896 = vsub.f32 %v869, %v892
    %v897 = vsub.f32 %v870, %v893
    %v898 = vmul.f32 %v894, %v894
    %v899 = vmul.f32 %v895, %v895
    %v900 = vmul.f32 %v896, %v896
    %v901 = vmul.f32 %v897, %v897
    %v902 = vsel %vm708, %v898, 0.0
    %903 = vadd.xlane.f32.xlu0 %v902
    %v904 = vpop.xlane.xlu0 %903
    %v905 = vsel %vm708, %v899, 0.0
    %906 = vadd.xlane.f32.xlu0 %v905
    %v907 = vpop.xlane.xlu0 %906
    %v908 = vsel %vm708, %v900, 0.0
    %909 = vadd.xlane.f32.xlu0 %v908
    %v910 = vpop.xlane.xlu0 %909
    %v911 = vsel %vm708, %v901, 0.0
    %912 = vadd.xlane.f32.xlu0 %v911
    %v913 = vpop.xlane.xlu0 %912
    %v914 = vmul.f32 %v904, %v889
    %v915 = vmul.f32 %v907, %v889
    %v916 = vmul.f32 %v910, %v889
    %v917 = vmul.f32 %v913, %v889
    %v918 = vadd.f32 %v914, 1e-05
    %v919 = vadd.f32 %v915, 1e-05
    %v920 = vadd.f32 %v916, 1e-05
    %v921 = vadd.f32 %v917, 1e-05
    %v922 = vrsqrt.pop %v918
    %v923 = vmul.f32 %v922, %v918
    %v924 = vmul.f32 %v923, %v922
    %v925 = vmul.f32 0.5, %v924
    %v926 = vsub.f32 1.5, %v925
    %v927 = vmul.f32 %v922, %v926
    %vm928 = vweird.f32 %v918
    %vm929 = vweird.f32 %v922
    %vm930 = vmor %vm928, %vm929
    %v931 = vsel %vm930, %v922, %v927
    %v932 = vrsqrt.pop %v919
    %v933 = vmul.f32 %v932, %v919
    %v934 = vmul.f32 %v933, %v932
    %v935 = vmul.f32 0.5, %v934
    %v936 = vsub.f32 1.5, %v935
    %v937 = vmul.f32 %v932, %v936
    %vm938 = vweird.f32 %v919
    %vm939 = vweird.f32 %v932
    %vm940 = vmor %vm938, %vm939
    %v941 = vsel %vm940, %v932, %v937
    %v942 = vrsqrt.pop %v920
    %v943 = vmul.f32 %v942, %v920
    %v944 = vmul.f32 %v943, %v942
    %v945 = vmul.f32 0.5, %v944
    %v946 = vsub.f32 1.5, %v945
    %v947 = vmul.f32 %v942, %v946
    %vm948 = vweird.f32 %v920
    %vm949 = vweird.f32 %v942
    %vm950 = vmor %vm948, %vm949
    %v951 = vsel %vm950, %v942, %v947
    %v952 = vrsqrt.pop %v921
    %v953 = vmul.f32 %v952, %v921
    %v954 = vmul.f32 %v953, %v952
    %v955 = vmul.f32 0.5, %v954
    %v956 = vsub.f32 1.5, %v955
    %v957 = vmul.f32 %v952, %v956
    %vm958 = vweird.f32 %v921
    %vm959 = vweird.f32 %v952
    %vm960 = vmor %vm958, %vm959
    %v961 = vsel %vm960, %v952, %v957
    %v962 = vmul.f32 %v894, %v931
    %v963 = vmul.f32 %v895, %v941
    %v964 = vmul.f32 %v896, %v951
    %v965 = vmul.f32 %v897, %v961
    %v966 = vld [vmem:[%s10] sm:$0x1]
    %v968 = vperm.slane %v966, 0
    %v970 = vmul.f32 %v962, %v968
    %v971 = vmul.f32 %v963, %v968
    %v972 = vmul.f32 %v964, %v968
    %v973 = vmul.f32 %v965, %v968
    %v974 = vld [vmem:[%s11] sm:$0x1]
    %v976 = vperm.slane %v974, 0
    %v978 = vadd.f32 %v970, %v976
    %v979 = vadd.f32 %v971, %v976
    %v980 = vadd.f32 %v972, %v976
    %v981 = vadd.f32 %v973, %v976
    %v982 = vmax.f32 %v978, 0.0
    %v983 = vmax.f32 %v979, 0.0
    %v984 = vmax.f32 %v980, 0.0
    %v985 = vmax.f32 %v981, 0.0
    %v986 = vadd.f32 %v982, %v55
    %v987 = vadd.f32 %v983, %v56
    %v988 = vadd.f32 %v984, %v57
    %v989 = vadd.f32 %v985, %v58
    %v990 = vsel %vm708, %v986, 0.0
    %v991 = vsel %vm708, %v987, 0.0
    %v992 = vadd.f32 %v990, %v991
    %v993 = vrot.slane %v992, 4
    %v994 = vadd.f32 %v992, %v993
    %v995 = vrot.slane %v994, 2
    %v996 = vadd.f32 %v994, %v995
    %v997 = vrot.slane %v996, 1
    %v998 = vadd.f32 %v996, %v997
    %v999 = vsel %vm708, %v988, 0.0
    %v1000 = vsel %vm708, %v989, 0.0
    %v1001 = vadd.f32 %v999, %v1000
    %v1002 = vrot.slane %v1001, 4
    %v1003 = vadd.f32 %v1001, %v1002
    %v1004 = vrot.slane %v1003, 2
    %v1005 = vadd.f32 %v1003, %v1004
    %v1006 = vrot.slane %v1005, 1
    %v1007 = vadd.f32 %v1005, %v1006
    %v1008 = vmul.f32 %v998, %v795
    %v1009 = vmul.f32 %v1007, %v795
    %v1010 = vld [vmem:[%s12] sm:$0xff]
    %v1011 = vld [vmem:[%s12 + $0x8] sm:$0xff]
    %v1012 = vld [vmem:[%s12 + $0x10] sm:$0xff]
    %v1013 = vld [vmem:[%s12 + $0x18] sm:$0xff]
    %v1014 = vld [vmem:[%s13] sm:$0xff]
    %v1015 = vld [vmem:[%s13 + $0x8] sm:$0xff]
    %v1016 = vld [vmem:[%s13 + $0x10] sm:$0xff]
    %v1017 = vld [vmem:[%s13 + $0x18] sm:$0xff]
    %vm1020 = vcmask 1041409
    %v1021 = vsel %vm1020, %v1009, %v1008
    %v1022 = vsel %vm708, %v1021, 0
    %1024 = vmatpush.msra.mxu0 0.0
    %1025 = vmatpush.msra.mxu0 0.0
    %1026 = vmatpush.msra.mxu0 0.0
    %1027 = vmatpush.msra.mxu0 0.0
    %1028 = vmatpush.msra.mxu0 0.0
    %1029 = vmatpush.msra.mxu0 0.0
    %1030 = vmatpush.msra.mxu0 0.0
    %1031 = vmatpush.msra.mxu0 0.0
    %1032 = vmatpush.msra.mxu0 0.0
    %1033 = vmatpush.msra.mxu0 0.0
    %1034 = vmatpush.msra.mxu0 0.0
    %1035 = vmatpush.msra.mxu0 0.0
    %1036 = vmatpush.msra.mxu0 %v1017
    %1037 = vmatpush.msra.mxu0 %v1016
    %1038 = vmatpush.msra.mxu0 %v1015
    %1039 = vmatpush.msra.mxu0 %v1014
    %1040 = vmatmul.f32.gmra.mxu0 %v1022
    %v1041 = vpop.f32.mrf.mxu0
    %v1042 = vadd.f32 0.0, %v1041
    %1043 = vdwg.mxu0
    %v1046 = vsel %vm1020, %v797, %v796
    %v1047 = vsel %vm708, %v1046, 0
    %1049 = vmatpush.msra.mxu0 0.0
    %1050 = vmatpush.msra.mxu0 0.0
    %1051 = vmatpush.msra.mxu0 0.0
    %1052 = vmatpush.msra.mxu0 0.0
    %1053 = vmatpush.msra.mxu0 0.0
    %1054 = vmatpush.msra.mxu0 0.0
    %1055 = vmatpush.msra.mxu0 0.0
    %1056 = vmatpush.msra.mxu0 0.0
    %1057 = vmatpush.msra.mxu0 0.0
    %1058 = vmatpush.msra.mxu0 0.0
    %1059 = vmatpush.msra.mxu0 0.0
    %1060 = vmatpush.msra.mxu0 0.0
    %1061 = vmatpush.msra.mxu0 %v1013
    %1062 = vmatpush.msra.mxu0 %v1012
    %1063 = vmatpush.msra.mxu0 %v1011
    %1064 = vmatpush.msra.mxu0 %v1010
    %1065 = vmatmul.f32.gmra.mxu0 %v1047
    %v1066 = vpop.f32.mrf.mxu0
    %v1067 = vadd.f32 %v1042, %v1066
    %1068 = vdwg.mxu0
    %v1069 = vld [vmem:[%s14] sm:$0x1]
    %v1071 = vperm.slane %v1069, 0
    %v1073 = vadd.f32 %v1067, %v1071
    %vm1074 = vcmask 517120
    %1075 = vst.msk [vmem:[#allocation2] sm:$0x3] %vm1074, %v1073
    // Predicated region
    $region62: #{tpu_custom_call.1} parent=1 // pred_check
      _
    $region63: #{tpu_custom_call.1} parent=1 // pred_check_branch
      %1077 = sbr.rel (0) target = $region65
    $region64: #{tpu_custom_call.1} parent=1 // pred_region
      %1079 = vsyncadd [#allocation3], 0
      %s1081 = sshll.u32 [#allocation2], 4
      %s1082 = int_to_ptr.vmem [resolvable:$true] %s1081
      %s1083 = sshll.u32 %s15, 4
      %s1084 = int_to_ptr.hbm [resolvable:$true] %s1083
      %1086 = dma.vmem_to_hbm [thread:$0]  %s1082, 32, %s1084, [#allocation3]
    $region65: #{tpu_custom_call.1} parent=1 // pred_fallthru
      _
    // Predicated region
    $region66: #{tpu_custom_call.1} parent=1 // pred_check
      _
    $region67: #{tpu_custom_call.1} parent=1 // pred_check_branch
      %1088 = sbr.rel (0) target = $region69
    $region68: #{tpu_custom_call.1} parent=1 // pred_region
      %1090 = dma.done [#allocation3], 32
    $region69: #{tpu_custom_call.1} parent=1 // pred_fallthru
      _
    %1091 = vsyncpa [#allocation3], 1

</llo_original>
